<compile_context>
chip_gen: v6e
topology: v6e:2x2x1
jax: 0.10.0
libtpu: 0.0.40
codegen_flags: <defaults>
</compile_context>

<pallas_src>
import jax
import jax.numpy as jnp
from jax.experimental import pallas as pl
from jax.experimental.pallas import tpu as pltpu


def _round_up(x, m):
    return ((x + m - 1) // m) * m


def _pick_lane_chunk(tb):
    """Largest sub-chunk (<=512 lanes) that evenly divides the batch tile."""
    for c in (512, 256, 128):
        if tb > c and tb % c == 0:
            return c
    return None  # tile already small (or full-extent demo block): no chunking


def _make_net_kernel(tb, n_feature, lane_chunk):
    """Fused Linear -> ReLU -> Linear kernel for one (n_feature, tb) batch tile."""

    def _compute(xT, w1, b1, w2, b2, out_dtype):
        # ---- Layer 1: depth-n_feature contraction as VPU broadcast-FMAs ----
        hT = w1[:, 0:1] * xT[0:1, :] + b1                 # (H,1)*(1,c)+(H,1) -> (H,c)
        for f in range(1, n_feature):                      # static unroll (F == 2)
            hT = hT + w1[:, f:f + 1] * xT[f:f + 1, :]
        hT = jnp.maximum(hT, 0.0)                          # F.relu
        # ---- Layer 2: (O,H) @ (H,c) on the MXU; result stays lane-dense ----
        yT = jnp.dot(w2, hT, preferred_element_type=jnp.float32)
        return (yT + b2).astype(out_dtype)

    def kernel(xT_ref, w1_ref, b1_ref, w2_ref, b2_ref, oT_ref):
        w1 = w1_ref[...]                                   # (H, F)  PyTorch [out, in]
        b1 = b1_ref[...]                                   # (H, 1)
        w2 = w2_ref[...]                                   # (O, H)
        b2 = b2_ref[...]                                   # (O, 1)

        if lane_chunk is None:
            # Small tile: whole block at once (hidden activation fits in vregs).
            oT_ref[...] = _compute(xT_ref[...], w1, b1, w2, b2, oT_ref.dtype)
        else:
            # Large tile: lane-chunked so the (H, chunk) hidden activation never
            # materializes as a (H, tb) VMEM temp.  Static slices are free views.
            for c in range(tb // lane_chunk):
                sl = slice(c * lane_chunk, (c + 1) * lane_chunk)
                oT_ref[:, sl] = _compute(xT_ref[:, sl], w1, b1, w2, b2,
                                         oT_ref.dtype)

    return kernel


def net_forward_T(xT, w1, b1_col, w2, b2_col, *, max_tile_b=16384):
    """Forward pass of Net in transposed (feature-major) layout.

    xT     : (n_feature, B) float32   -- batch on the trailing (lane) axis
    w1     : (n_hidden, n_feature)    -- PyTorch [out, in] layout (NOT transposed)
    b1_col : (n_hidden, 1)
    w2     : (n_output, n_hidden)
    b2_col : (n_output, 1)
    returns (n_output, B) float32
    """
    n_feature, B = xT.shape
    n_hidden = w1.shape[0]
    n_output = w2.shape[0]

    # (8,128) rule: any multi-step lane tile must be a multiple of 128 lanes.
    max_tile_b = max(128, (max_tile_b // 128) * 128)

    if B <= 1024:
        # Tiny batch (the demo): one full-extent block, no padding, one grid
        # step (an extra step's ~0.35us overhead outweighs any parallelism).
        Bp, tb, x_in = B, B, xT
    else:
        # Pad once to a lane-aligned batch so all DMAs / stores are unmasked.
        Bp = _round_up(B, 128)
        x_in = xT if Bp == B else jnp.pad(xT, ((0, 0), (0, Bp - B)))
        # Cap the tile at ~half the batch so the "parallel" grid has >= 2
        # steps (keeps both v7x TensorCores busy); never exceed max_tile_b.
        tb = min(max_tile_b, _round_up(pl.cdiv(Bp, 2), 128))
    nb = pl.cdiv(Bp, tb)

    lane_chunk = _pick_lane_chunk(tb)

    # VMEM budget sanity (double-buffered x/y tiles + resident params).  Stays
    # orders of magnitude under v7x's 64 MiB (32 MiB scoped default) unless tb
    # is pushed past ~1M lanes; assert so a future max_tile_b bump can't
    # silently overshoot.
    vmem_bytes = (2 * 4 * tb * (n_feature + n_output)
                  + 2 * 4 * (w1.size + b1_col.size + w2.size + b2_col.size))
    assert vmem_bytes < 30 * 2 ** 20, vmem_bytes

    flops = 2 * Bp * (n_feature * n_hidden + n_hidden * n_output)
    bytes_accessed = 4 * (n_feature * Bp + n_output * Bp + w1.size
                          + b1_col.size + w2.size + b2_col.size)
    cost = pl.CostEstimate(flops=flops, transcendentals=0,
                           bytes_accessed=bytes_accessed)

    kernel = _make_net_kernel(tb, n_feature, lane_chunk)

    yT = pl.pallas_call(
        kernel,
        out_shape=jax.ShapeDtypeStruct((n_output, Bp), jnp.float32),
        grid=(nb,),
        in_specs=[
            pl.BlockSpec((n_feature, tb), lambda i: (0, i)),         # x^T lane tile
            pl.BlockSpec((n_hidden, n_feature), lambda i: (0, 0)),   # W1 (resident)
            pl.BlockSpec((n_hidden, 1), lambda i: (0, 0)),           # b1 column
            pl.BlockSpec((n_output, n_hidden), lambda i: (0, 0)),    # W2 (resident)
            pl.BlockSpec((n_output, 1), lambda i: (0, 0)),           # b2 column
        ],
        out_specs=pl.BlockSpec((n_output, tb), lambda i: (0, i)),
        compiler_params=pltpu.CompilerParams(
            dimension_semantics=("parallel",)),
        cost_estimate=cost,
    )(x_in, w1, b1_col, w2, b2_col)

    return yT if Bp == B else yT[:, :B]


def init_linear_params(key, in_features, out_features):
    """torch.nn.Linear-style init; bias produced directly as an (out, 1)
    column so the hot path never reshapes/transposes parameters."""
    kw, kb = jax.random.split(key)
    bound = 1.0 / jnp.sqrt(jnp.float32(in_features))
    w = jax.random.uniform(kw, (out_features, in_features), jnp.float32,
                           -bound, bound)
    b = jax.random.uniform(kb, (out_features, 1), jnp.float32, -bound, bound)
    return w, b


def _reference(xT, w1, b1_col, w2, b2_col):
    # Plain-JAX reference with the original PyTorch (batch-major) math.
    x = xT.T
    h = jnp.maximum(x @ w1.T + b1_col.ravel(), 0.0)
    return (h @ w2.T + b2_col.ravel()).T


if __name__ == "__main__":
    # Shapes implied by the surrounding script: x = cat of two (100, 2) blobs
    # -> batch 200; Net(n_feature=2, n_hidden=32, n_output=2).
    n_feature, n_hidden, n_output = 2, 32, 2
    batch = 200

    key = jax.random.PRNGKey(0)
    k_x, k_l1, k_l2 = jax.random.split(key, 3)

    # Deterministic stand-in for torch.normal(+-2, 1) data, built directly in
    # the kernel's (n_feature, B) layout (no wrapper-side transposes).
    base = jax.random.normal(k_x, (n_feature, batch), jnp.float32)
    signs = jnp.concatenate(
        [jnp.full((n_feature, batch // 2), 2.0, jnp.float32),
         jnp.full((n_feature, batch // 2), -2.0, jnp.float32)], axis=1)
    xT = base + signs

    w1, b1 = init_linear_params(k_l1, n_feature, n_hidden)   # b1: (32, 1)
    w2, b2 = init_linear_params(k_l2, n_hidden, n_output)    # b2: (2, 1)

    # --- demo-sized batch: single full-extent block path ---
    outT = jax.block_until_ready(net_forward_T(xT, w1, b1, w2, b2))
    assert outT.shape == (n_output, batch)
    assert jnp.allclose(outT, _reference(xT, w1, b1, w2, b2),
                        atol=1e-5, rtol=1e-5)

    # --- larger batch: exercises padding, multi-step "parallel" grid, the
    #     lane-chunk loop, and the partial (masked) last output tile ---
    big_batch = 3000
    xT_big = jax.random.normal(jax.random.PRNGKey(1),
                               (n_feature, big_batch), jnp.float32)
    outT_big = jax.block_until_ready(
        net_forward_T(xT_big, w1, b1, w2, b2, max_tile_b=1280))
    assert outT_big.shape == (n_output, big_batch)
    assert jnp.allclose(outT_big, _reference(xT_big, w1, b1, w2, b2),
                        atol=1e-5, rtol=1e-5)

    print("KERNEL_OK")
</pallas_src>

<mosaic_0001>
module attributes {stable_mosaic.version = 11 : i64} {
  func.func @kernel(%arg0: i32, %arg1: memref<2x200xf32, #tpu.memory_space<vmem>>, %arg2: memref<32x2xf32, #tpu.memory_space<vmem>>, %arg3: memref<32x1xf32, #tpu.memory_space<vmem>>, %arg4: memref<2x32xf32, #tpu.memory_space<vmem>>, %arg5: memref<2x1xf32, #tpu.memory_space<vmem>>, %arg6: memref<2x200xf32, #tpu.memory_space<vmem>>) attributes {dimension_semantics = [#tpu.dimension_semantics<parallel>], iteration_bounds = array<i64: 1>, scalar_prefetch = 0 : i64, scratch_operands = 0 : i64, tpu.core_type = #tpu.core_type<tc>, window_params = [{transform_indices = @transform_0, window_bounds = array<i64: 2, 200>}, {pipeline_mode = #tpu.pipeline_mode<synchronous>, transform_indices = @transform_1, window_bounds = array<i64: 32, 2>}, {pipeline_mode = #tpu.pipeline_mode<synchronous>, transform_indices = @transform_2, window_bounds = array<i64: 32, 1>}, {pipeline_mode = #tpu.pipeline_mode<synchronous>, transform_indices = @transform_3, window_bounds = array<i64: 2, 32>}, {pipeline_mode = #tpu.pipeline_mode<synchronous>, transform_indices = @transform_4, window_bounds = array<i64: 2, 1>}, {transform_indices = @transform_5, window_bounds = array<i64: 2, 200>}]} {
    %c0 = arith.constant 0 : index
    %c0_0 = arith.constant 0 : index
    %0 = vector.load %arg2[%c0, %c0_0] : memref<32x2xf32, #tpu.memory_space<vmem>>, vector<32x2xf32>
    %c0_1 = arith.constant 0 : index
    %c0_2 = arith.constant 0 : index
    %1 = vector.load %arg3[%c0_1, %c0_2] : memref<32x1xf32, #tpu.memory_space<vmem>>, vector<32x1xf32>
    %c0_3 = arith.constant 0 : index
    %c0_4 = arith.constant 0 : index
    %2 = vector.load %arg4[%c0_3, %c0_4] : memref<2x32xf32, #tpu.memory_space<vmem>>, vector<2x32xf32>
    %c0_5 = arith.constant 0 : index
    %c0_6 = arith.constant 0 : index
    %3 = vector.load %arg5[%c0_5, %c0_6] : memref<2x1xf32, #tpu.memory_space<vmem>>, vector<2x1xf32>
    %c0_7 = arith.constant 0 : index
    %c0_8 = arith.constant 0 : index
    %4 = vector.load %arg1[%c0_7, %c0_8] : memref<2x200xf32, #tpu.memory_space<vmem>>, vector<2x200xf32>
    %5 = vector.extract_strided_slice %0 {offsets = [0, 0], sizes = [32, 1], strides = [1, 1]} : vector<32x2xf32> to vector<32x1xf32>
    %6 = vector.extract_strided_slice %4 {offsets = [0, 0], sizes = [1, 200], strides = [1, 1]} : vector<2x200xf32> to vector<1x200xf32>
    %7 = vector.broadcast %5 : vector<32x1xf32> to vector<32x200xf32>
    %8 = vector.broadcast %6 : vector<1x200xf32> to vector<32x200xf32>
    %9 = arith.mulf %7, %8 : vector<32x200xf32>
    %10 = vector.broadcast %1 : vector<32x1xf32> to vector<32x200xf32>
    %11 = arith.addf %9, %10 : vector<32x200xf32>
    %12 = vector.extract_strided_slice %0 {offsets = [0, 1], sizes = [32, 1], strides = [1, 1]} : vector<32x2xf32> to vector<32x1xf32>
    %13 = vector.extract_strided_slice %4 {offsets = [1, 0], sizes = [1, 200], strides = [1, 1]} : vector<2x200xf32> to vector<1x200xf32>
    %14 = vector.broadcast %12 : vector<32x1xf32> to vector<32x200xf32>
    %15 = vector.broadcast %13 : vector<1x200xf32> to vector<32x200xf32>
    %16 = arith.mulf %14, %15 : vector<32x200xf32>
    %17 = arith.addf %11, %16 : vector<32x200xf32>
    %cst = arith.constant 0.000000e+00 : f32
    %18 = vector.broadcast %cst : f32 to vector<32x200xf32>
    %19 = arith.maximumf %17, %18 : vector<32x200xf32>
    %cst_9 = arith.constant dense<0.000000e+00> : vector<2x200xf32>
    %20 = tpu.matmul %2, %19, %cst_9 {dimension_numbers = #tpu.dot_dimension_numbers<[1], [0], [0], [1], [0, 0, 1, 1], [], []>} : vector<2x32xf32>, vector<32x200xf32>, vector<2x200xf32> -> vector<2x200xf32>
    %21 = vector.broadcast %3 : vector<2x1xf32> to vector<2x200xf32>
    %22 = arith.addf %20, %21 : vector<2x200xf32>
    %c0_10 = arith.constant 0 : index
    %c0_11 = arith.constant 0 : index
    %23 = vector.load %arg6[%c0_10, %c0_11] : memref<2x200xf32, #tpu.memory_space<vmem>>, vector<2x200xf32>
    tpu.vector_store %arg6[%c0_10, %c0_11], %22 {strides = array<i32>} : memref<2x200xf32, #tpu.memory_space<vmem>>, vector<2x200xf32>,
    return
  }
  func.func @transform_0(%arg0: i32) -> (i32, i32) {
    %c0_i32 = arith.constant 0 : i32
    %c0_i32_0 = arith.constant 0 : i32
    return %c0_i32, %arg0 : i32, i32
  }
  func.func @transform_1(%arg0: i32) -> (i32, i32) {
    %c0_i32 = arith.constant 0 : i32
    %c0_i32_0 = arith.constant 0 : i32
    %c0_i32_1 = arith.constant 0 : i32
    return %c0_i32, %c0_i32_0 : i32, i32
  }
  func.func @transform_2(%arg0: i32) -> (i32, i32) {
    %c0_i32 = arith.constant 0 : i32
    %c0_i32_0 = arith.constant 0 : i32
    %c0_i32_1 = arith.constant 0 : i32
    return %c0_i32, %c0_i32_0 : i32, i32
  }
  func.func @transform_3(%arg0: i32) -> (i32, i32) {
    %c0_i32 = arith.constant 0 : i32
    %c0_i32_0 = arith.constant 0 : i32
    %c0_i32_1 = arith.constant 0 : i32
    return %c0_i32, %c0_i32_0 : i32, i32
  }
  func.func @transform_4(%arg0: i32) -> (i32, i32) {
    %c0_i32 = arith.constant 0 : i32
    %c0_i32_0 = arith.constant 0 : i32
    %c0_i32_1 = arith.constant 0 : i32
    return %c0_i32, %c0_i32_0 : i32, i32
  }
  func.func @transform_5(%arg0: i32) -> (i32, i32) {
    %c0_i32 = arith.constant 0 : i32
    %c0_i32_0 = arith.constant 0 : i32
    return %c0_i32, %arg0 : i32, i32
  }
}

</mosaic_0001>

<llo_original>
// kernel: tpu_custom_call.1
$region0: #{tpu_custom_call.1}
  #allocation0 [shape = 'u32[]', space=smem, size = 0x4, offset = 0x4, fixed_abs, tag = 'smem constant byte address 0x4 - core index']
  #allocation1 [shape = 'u32[144,128]{1,0:T(1,128)}', space=vmem, size = 0x12000, scoped, tag = 'internal scratch']
  %s0 = inlined_call_operand.vmem [shape: f32[2,200], index: 0, kind: input, shape index: {}]
  %s1 = inlined_call_operand.vmem [shape: f32[32,2], index: 1, kind: input, shape index: {}]
  %s2 = inlined_call_operand.vmem [shape: f32[32,1], index: 2, kind: input, shape index: {}]
  %s3 = inlined_call_operand.vmem [shape: f32[2,32], index: 3, kind: input, shape index: {}]
  %s4 = inlined_call_operand.vmem [shape: f32[2,1], index: 4, kind: input, shape index: {}]
  %s5 = inlined_call_operand.hbm [shape: f32[2,200], index: 5, kind: output, shape index: {}]
  %s6 = sld [smem:[#allocation0]]
  $region30: #{tpu_custom_call.1} parent=0
    _
  %s8 = ssub.s32 1, %s6
  %s9 = scalar_select 0, %s8, %s6
  $region1: #{tpu_custom_call.1} parent=0
    #allocation2 [shape = 'u8[2048]{0}', space=vmem, size = 0x800, scoped, tag = 'output window, operand 0, single buffered']
    #allocation3 [shape = 's32[1]{0}', space=sflag, size = 0x4, scoped, tag = 'scoped memory for tpu_custom_call.1']
    %10 = vsyncpa [#allocation3], 0
    // Predicated region
    $region2: #{tpu_custom_call.1} parent=1 // pred_check
      _
    $region3: #{tpu_custom_call.1} parent=1 // pred_check_branch
      %12 = sbr.rel (0) target = $region5
    $region4: #{tpu_custom_call.1} parent=1 // pred_region
      _
    $region5: #{tpu_custom_call.1} parent=1 // pred_fallthru
      _
    // Predicated region
    $region6: #{tpu_custom_call.1} parent=1 // pred_check
      _
    $region7: #{tpu_custom_call.1} parent=1 // pred_check_branch
      %14 = sbr.rel (0) target = $region9
    $region8: #{tpu_custom_call.1} parent=1 // pred_region
      _
    $region9: #{tpu_custom_call.1} parent=1 // pred_fallthru
      _
    // Predicated region
    $region10: #{tpu_custom_call.1} parent=1 // pred_check
      _
    $region11: #{tpu_custom_call.1} parent=1 // pred_check_branch
      %16 = sbr.rel (0) target = $region13
    $region12: #{tpu_custom_call.1} parent=1 // pred_region
      _
    $region13: #{tpu_custom_call.1} parent=1 // pred_fallthru
      _
    // Predicated region
    $region14: #{tpu_custom_call.1} parent=1 // pred_check
      _
    $region15: #{tpu_custom_call.1} parent=1 // pred_check_branch
      %18 = sbr.rel (0) target = $region17
    $region16: #{tpu_custom_call.1} parent=1 // pred_region
      _
    $region17: #{tpu_custom_call.1} parent=1 // pred_fallthru
      _
    // Predicated region
    $region18: #{tpu_custom_call.1} parent=1 // pred_check
      _
    $region19: #{tpu_custom_call.1} parent=1 // pred_check_branch
      %20 = sbr.rel (0) target = $region21
    $region20: #{tpu_custom_call.1} parent=1 // pred_region
      _
    $region21: #{tpu_custom_call.1} parent=1 // pred_fallthru
      _
    %v21 = vld [vmem:[%s1] sm:$0xff]
    %v22 = vld [vmem:[%s1 + $0x8] sm:$0xff]
    %v23 = vld [vmem:[%s1 + $0x10] sm:$0xff]
    %v24 = vld [vmem:[%s1 + $0x18] sm:$0xff]
    %v25 = vld [vmem:[%s2] sm:$0xff]
    %v26 = vld [vmem:[%s2 + $0x8] sm:$0xff]
    %v27 = vld [vmem:[%s2 + $0x10] sm:$0xff]
    %v28 = vld [vmem:[%s2 + $0x18] sm:$0xff]
    %v29 = vld [vmem:[%s3] sm:$0x3]
    %v30 = vld [vmem:[%s4] sm:$0x3]
    %v31 = vld [vmem:[%s0] sm:$0xf]
    %33 = vset.pattern.permute.xlu0 0
    %34 = vperm.xlu0 %33, %v21
    %v35 = vpop.permute.xlu0 %34
    %38 = vset.pattern.permute.xlu0 0
    %39 = vperm.xlu0 %38, %v22
    %v40 = vpop.permute.xlu0 %39
    %43 = vset.pattern.permute.xlu0 0
    %44 = vperm.xlu0 %43, %v23
    %v45 = vpop.permute.xlu0 %44
    %48 = vset.pattern.permute.xlu0 0
    %49 = vperm.xlu0 %48, %v24
    %v50 = vpop.permute.xlu0 %49
    %v53 = vlaneseq
    %v54 = vshrl.u32 %v53, 7
    %v55 = vsub.s32 0, %v54
    %v56 = vrot.slane %v31, %v55
    %v57 = vlaneseq
    %v58 = vshrl.u32 %v57, 7
    %v59 = vsub.s32 2, %v58
    %v60 = vrot.slane %v31, %v59
    %v63 = vlaneseq
    %v64 = vshrl.u32 %v63, 7
    %v65 = vsub.s32 0, %v64
    %v66 = vrot.slane %v56, %v65
    %v67 = vlaneseq
    %v68 = vshrl.u32 %v67, 7
    %v69 = vsub.s32 0, %v68
    %v70 = vrot.slane %v60, %v69
    %v71 = vmul.f32 %v35, %v66
    %v72 = vmul.f32 %v35, %v70
    %v73 = vmul.f32 %v40, %v66
    %v74 = vmul.f32 %v40, %v70
    %v75 = vmul.f32 %v45, %v66
    %v76 = vmul.f32 %v45, %v70
    %v77 = vmul.f32 %v50, %v66
    %v78 = vmul.f32 %v50, %v70
    %80 = vset.pattern.permute.xlu0 0
    %81 = vperm.xlu0 %80, %v25
    %v82 = vpop.permute.xlu0 %81
    %85 = vset.pattern.permute.xlu0 0
    %86 = vperm.xlu0 %85, %v26
    %v87 = vpop.permute.xlu0 %86
    %90 = vset.pattern.permute.xlu0 0
    %91 = vperm.xlu0 %90, %v27
    %v92 = vpop.permute.xlu0 %91
    %95 = vset.pattern.permute.xlu0 0
    %96 = vperm.xlu0 %95, %v28
    %v97 = vpop.permute.xlu0 %96
    %v99 = vadd.f32 %v71, %v82
    %v100 = vadd.f32 %v72, %v82
    %v101 = vadd.f32 %v73, %v87
    %v102 = vadd.f32 %v74, %v87
    %v103 = vadd.f32 %v75, %v92
    %v104 = vadd.f32 %v76, %v92
    %v105 = vadd.f32 %v77, %v97
    %v106 = vadd.f32 %v78, %v97
    %107 = vset.pattern.permute.xlu0 1
    %108 = vperm.xlu0 %107, %v21
    %v109 = vpop.permute.xlu0 %108
    %111 = vset.pattern.permute.xlu0 1
    %112 = vperm.xlu0 %111, %v22
    %v113 = vpop.permute.xlu0 %112
    %115 = vset.pattern.permute.xlu0 1
    %116 = vperm.xlu0 %115, %v23
    %v117 = vpop.permute.xlu0 %116
    %119 = vset.pattern.permute.xlu0 1
    %120 = vperm.xlu0 %119, %v24
    %v121 = vpop.permute.xlu0 %120
    %v123 = vlaneseq
    %v124 = vshrl.u32 %v123, 7
    %v125 = vsub.s32 1, %v124
    %v126 = vrot.slane %v31, %v125
    %v127 = vlaneseq
    %v128 = vshrl.u32 %v127, 7
    %v129 = vsub.s32 3, %v128
    %v130 = vrot.slane %v31, %v129
    %v133 = vlaneseq
    %v134 = vshrl.u32 %v133, 7
    %v135 = vsub.s32 1, %v134
    %v136 = vrot.slane %v126, %v135
    %v137 = vlaneseq
    %v138 = vshrl.u32 %v137, 7
    %v139 = vsub.s32 1, %v138
    %v140 = vrot.slane %v130, %v139
    %v141 = vmul.f32 %v109, %v136
    %v142 = vmul.f32 %v109, %v140
    %v143 = vmul.f32 %v113, %v136
    %v144 = vmul.f32 %v113, %v140
    %v145 = vmul.f32 %v117, %v136
    %v146 = vmul.f32 %v117, %v140
    %v147 = vmul.f32 %v121, %v136
    %v148 = vmul.f32 %v121, %v140
    %v149 = vadd.f32 %v99, %v141
    %v150 = vadd.f32 %v100, %v142
    %v151 = vadd.f32 %v101, %v143
    %v152 = vadd.f32 %v102, %v144
    %v153 = vadd.f32 %v103, %v145
    %v154 = vadd.f32 %v104, %v146
    %v155 = vadd.f32 %v105, %v147
    %v156 = vadd.f32 %v106, %v148
    %v157 = vmax.f32 %v149, 0.0
    %v158 = vmax.f32 %v150, 0.0
    %v159 = vmax.f32 %v151, 0.0
    %v160 = vmax.f32 %v152, 0.0
    %v161 = vmax.f32 %v153, 0.0
    %v162 = vmax.f32 %v154, 0.0
    %v163 = vmax.f32 %v155, 0.0
    %v164 = vmax.f32 %v156, 0.0
    %166 = vset.pattern.permute.xlu0 0
    %167 = vperm.xlu0 %166, %v30
    %v168 = vpop.permute.xlu0 %167
    %vm170 = vcmask 261120
    %v172 = vsel %vm170, %v29, 0
    %174 = vmatprep.subr.mxu0 0.0
    %175 = vmatpush1.msra.mxu0 0.0
    %176 = vmatprep.subr.mxu0 0.0
    %177 = vmatpush1.msra.mxu0 0.0
    %178 = vmatprep.subr.mxu0 0.0
    %179 = vmatpush1.msra.mxu0 0.0
    %180 = vmatprep.subr.mxu0 0.0
    %181 = vmatpush1.msra.mxu0 0.0
    %182 = vmatprep.subr.mxu0 0.0
    %183 = vmatpush1.msra.mxu0 0.0
    %184 = vmatprep.subr.mxu0 0.0
    %185 = vmatpush1.msra.mxu0 0.0
    %186 = vmatprep.subr.mxu0 0.0
    %187 = vmatpush1.msra.mxu0 0.0
    %188 = vmatprep.subr.mxu0 0.0
    %189 = vmatpush1.msra.mxu0 0.0
    %190 = vmatprep.subr.mxu0 0.0
    %191 = vmatpush1.msra.mxu0 0.0
    %192 = vmatprep.subr.mxu0 0.0
    %193 = vmatpush1.msra.mxu0 0.0
    %194 = vmatprep.subr.mxu0 0.0
    %195 = vmatpush1.msra.mxu0 0.0
    %196 = vmatprep.subr.mxu0 0.0
    %197 = vmatpush1.msra.mxu0 0.0
    %198 = vmatprep.subr.mxu0 %v164
    %199 = vmatpush1.msra.mxu0 %v163
    %200 = vmatprep.subr.mxu0 %v162
    %201 = vmatpush1.msra.mxu0 %v161
    %202 = vmatprep.subr.mxu0 %v160
    %203 = vmatpush1.msra.mxu0 %v159
    %204 = vmatprep.subr.mxu0 %v158
    %205 = vmatpush1.msra.mxu0 %v157
    %206 = vmatprep.subr.mxu0 0.0
    %207 = vmatpush2.msra.mxu0 0.0
    %208 = vmatprep.subr.mxu0 0.0
    %209 = vmatpush2.msra.mxu0 0.0
    %210 = vmatprep.subr.mxu0 0.0
    %211 = vmatpush2.msra.mxu0 0.0
    %212 = vmatprep.subr.mxu0 0.0
    %213 = vmatpush2.msra.mxu0 0.0
    %214 = vmatprep.subr.mxu0 0.0
    %215 = vmatpush2.msra.mxu0 0.0
    %216 = vmatprep.subr.mxu0 0.0
    %217 = vmatpush2.msra.mxu0 0.0
    %218 = vmatprep.subr.mxu0 0.0
    %219 = vmatpush2.msra.mxu0 0.0
    %220 = vmatprep.subr.mxu0 0.0
    %221 = vmatpush2.msra.mxu0 0.0
    %222 = vmatprep.subr.mxu0 0.0
    %223 = vmatpush2.msra.mxu0 0.0
    %224 = vmatprep.subr.mxu0 0.0
    %225 = vmatpush2.msra.mxu0 0.0
    %226 = vmatprep.subr.mxu0 0.0
    %227 = vmatpush2.msra.mxu0 0.0
    %228 = vmatprep.subr.mxu0 0.0
    %229 = vmatpush2.msra.mxu0 0.0
    %230 = vmatprep.subr.mxu0 0.0
    %231 = vmatpush2.msra.mxu0 0.0
    %232 = vmatprep.subr.mxu0 0.0
    %233 = vmatpush2.msra.mxu0 0.0
    %234 = vmatprep.subr.mxu0 0.0
    %235 = vmatpush2.msra.mxu0 0.0
    %236 = vmatprep.subr.mxu0 0.0
    %237 = vmatpush2.msra.mxu0 0.0
    %238 = vmatprep.mubr.f32.mxu0 0.0
    %239 = vmatmul.mubr.f32.gmra.mxu0 %v172
    %v240 = vpop.f32.mrf.mxu0
    %v241 = vadd.f32 %v168, %v240
    %v242 = vpop.f32.mrf.mxu0
    %v243 = vadd.f32 %v168, %v242
    %244 = vdwg.mxu0
    %v247 = vcombine.low %v241, %v243
    %v249 = vunpack.c.l.s4 1983009808
    %v250 = vunpack.c.0.s8 %v249
    %v251 = vlaneseq
    %v252 = vshrl.u32 %v251, 7
    %v253 = vsub.s32 %v250, %v252
    %v254 = vrot.slane %v247, %v253
    %vm256 = vcmask 1041408
    %vm257 = vcmask 584706
    %vm258 = vmor %vm257, %vm256
    %259 = vst.msk [vmem:[#allocation2] sm:$0xf] %vm258, %v254
    // Predicated region
    $region22: #{tpu_custom_call.1} parent=1 // pred_check
      _
    $region23: #{tpu_custom_call.1} parent=1 // pred_check_branch
      %261 = sbr.rel (0) target = $region25
    $region24: #{tpu_custom_call.1} parent=1 // pred_region
      %s263 = ssub.s32 64, 64
      %264 = vsyncadd [#allocation3], %s263
      %s266 = sshll.u32 [#allocation2], 4
      %s267 = int_to_ptr.vmem [resolvable:$true] %s266
      %269 = dma.vmem_to_hbm [thread:$0]  %s267, 64, %s5, [#allocation3]
    $region25: #{tpu_custom_call.1} parent=1 // pred_fallthru
      _
    // Predicated region
    $region26: #{tpu_custom_call.1} parent=1 // pred_check
      _
    $region27: #{tpu_custom_call.1} parent=1 // pred_check_branch
      %271 = sbr.rel (0) target = $region29
    $region28: #{tpu_custom_call.1} parent=1 // pred_region
      %272 = dma.done [#allocation3], 64
    $region29: #{tpu_custom_call.1} parent=1 // pred_fallthru
      _
    %273 = vsyncpa [#allocation3], 1

</llo_original>
